<compile_context>
chip_gen: v6e
topology: v6e:2x2x1
jax: 0.10.0
libtpu: 0.0.40
codegen_flags: <defaults>
</compile_context>

<pallas_src>
import jax
import jax.numpy as jnp
import numpy as np
from jax.experimental import pallas as pl
from jax.experimental.pallas import tpu as pltpu  # noqa: F401  (TPU-specific tuning hooks)


def _round_up(n, m):
    return (n + m - 1) // m * m


def _make_kernel(b, mb, x_dim, hidden, out_sz, offs):
    """Builds the kernel closure over static shapes / slab row offsets."""
    w1_r, b1_r, w2_r, b2_r, w3_r, b3_r = offs
    inv_mb = 1.0 / float(mb)

    def kernel(x_ref, params_ref, o_ref):
        x = x_ref[...]                                            # (b*mb, x_dim)

        # Static, 8-row-aligned slices of the packed parameter slab.  These are
        # plain VMEM loads from the single slab window -- no per-tensor DMA.
        w1 = params_ref[w1_r:w1_r + x_dim, :][:, :hidden]         # (x_dim, H)
        b1 = params_ref[b1_r:b1_r + 1, :][:, :hidden]             # (1, H)
        w2 = params_ref[w2_r:w2_r + hidden, :][:, :hidden]        # (H, H)
        b2 = params_ref[b2_r:b2_r + 1, :][:, :hidden]             # (1, H)
        w3 = params_ref[w3_r:w3_r + hidden, :][:, :out_sz]        # (H, out)
        b3 = params_ref[b3_r:b3_r + 1, :][:, :out_sz]             # (1, out)

        h1 = jnp.maximum(
            jnp.dot(x, w1, preferred_element_type=jnp.float32) + b1, 0.0)   # ReLU
        h2 = jnp.maximum(
            jnp.dot(h1, w2, preferred_element_type=jnp.float32) + b2, 0.0)  # ReLU
        y = jnp.tanh(
            jnp.dot(h2, w3, preferred_element_type=jnp.float32) + b3)       # (b*mb, out)

        # Minibatch mean as a sublane-group reduction (VPU/XLU), not a 4th MXU
        # matmul: the reshape only splits the row axis into 8-row groups.
        y3 = y.reshape(b, mb, out_sz)
        mean = jnp.sum(y3, axis=1) * inv_mb                        # (b, out)

        # NOTE: at out_sz=8 this is a masked partial store (harmless at this
        # size); pad/slice to a 128-multiple lane width if out_sz ever grows.
        o_ref[...] = mean.astype(o_ref.dtype)

    return kernel


def data_aggregator_forward(X, w1, b1, w2, b2, w3, b3):
    """X: (b, mb, x_dim) float32. w*: (in, out) layout. Returns (b, output_size) f32."""
    b, mb, x_dim = X.shape
    hidden = w1.shape[1]
    out_sz = w3.shape[1]
    rows = b * mb
    C = max(hidden, out_sz)                      # common slab column width

    # Fuse batch and minibatch into the matmul row axis (wrapper-side reshape).
    Xf = X.reshape(rows, x_dim).astype(jnp.float32)

    # Pack all parameters into one contiguous f32 slab: each section starts on
    # an 8-row (sublane) boundary; columns zero-padded to C.
    parts, offs, row = [], [], 0
    for arr in (w1, b1.reshape(1, -1), w2, b2.reshape(1, -1), w3, b3.reshape(1, -1)):
        arr = arr.astype(jnp.float32)
        r_pad = _round_up(arr.shape[0], 8)
        parts.append(jnp.pad(arr, ((0, r_pad - arr.shape[0]), (0, C - arr.shape[1]))))
        offs.append(row)
        row += r_pad
    params = jnp.concatenate(parts, axis=0)      # (total_rows, C)

    kernel = _make_kernel(b, mb, x_dim, hidden, out_sz, tuple(offs))

    flops = 2 * rows * (x_dim * hidden + hidden * hidden + hidden * out_sz) + rows * out_sz
    cost = pl.CostEstimate(
        flops=flops,
        transcendentals=rows * out_sz,           # tanh
        bytes_accessed=Xf.size * 4 + params.size * 4 + b * out_sz * 4,
    )

    # Single invocation: no grid, every operand is one full-extent VMEM block,
    # exactly two input DMAs (X + packed params).
    return pl.pallas_call(
        kernel,
        out_shape=jax.ShapeDtypeStruct((b, out_sz), jnp.float32),
        in_specs=[
            pl.BlockSpec((rows, x_dim), lambda: (0, 0)),       # fused-row input
            pl.BlockSpec(params.shape, lambda: (0, 0)),        # packed parameter slab
        ],
        out_specs=pl.BlockSpec((b, out_sz), lambda: (0, 0)),
        cost_estimate=cost,
    )(Xf, params)


def _reference_forward(X, w1, b1, w2, b2, w3, b3):
    b, mb, x_dim = X.shape
    x = X.reshape(-1, x_dim)
    h = jnp.maximum(x @ w1 + b1, 0.0)
    h = jnp.maximum(h @ w2 + b2, 0.0)
    y = jnp.tanh(h @ w3 + b3)
    return y.reshape(b, mb, -1).mean(axis=1)


if __name__ == "__main__":
    # Config consistent with the module's forward:
    #   input_size = 16, hidden_size = 32, output_size = 8
    #   X: (b_size=2, mb_size=8, x_dim=16)
    b_size, mb_size = 2, 8
    input_size, hidden_size, output_size = 16, 32, 8

    key = jax.random.PRNGKey(0)
    kx, k1, k2, k3, k4, k5, k6 = jax.random.split(key, 7)

    X = jax.random.normal(kx, (b_size, mb_size, input_size), dtype=jnp.float32)

    # Deterministic parameter init (uniform, roughly torch.nn.Linear-like).
    def uinit(k, shape, fan_in):
        bound = 1.0 / np.sqrt(fan_in)
        return jax.random.uniform(k, shape, jnp.float32, -bound, bound)

    w1 = uinit(k1, (input_size, hidden_size), input_size)
    b1 = uinit(k2, (hidden_size,), input_size)
    w2 = uinit(k3, (hidden_size, hidden_size), hidden_size)
    b2 = uinit(k4, (hidden_size,), hidden_size)
    w3 = uinit(k5, (hidden_size, output_size), hidden_size)
    b3 = uinit(k6, (output_size,), hidden_size)

    out = data_aggregator_forward(X, w1, b1, w2, b2, w3, b3)
    out = jax.block_until_ready(out)

    ref = _reference_forward(X, w1, b1, w2, b2, w3, b3)
    np.testing.assert_allclose(np.asarray(out), np.asarray(ref),
                               rtol=1e-5, atol=1e-5)

    print("KERNEL_OK")
</pallas_src>

<mosaic_0001>
module attributes {stable_mosaic.version = 11 : i64} {
  func.func @kernel(%arg0: memref<16x16xf32, #tpu.memory_space<vmem>>, %arg1: memref<104x32xf32, #tpu.memory_space<vmem>>, %arg2: memref<2x8xf32, #tpu.memory_space<vmem>>) attributes {dimension_semantics = [], scalar_prefetch = 0 : i64, scratch_operands = 0 : i64, tpu.core_type = #tpu.core_type<tc>} {
    %c0 = arith.constant 0 : index
    %c0_0 = arith.constant 0 : index
    %0 = vector.load %arg0[%c0, %c0_0] : memref<16x16xf32, #tpu.memory_space<vmem>>, vector<16x16xf32>
    %c0_1 = arith.constant 0 : index
    %c0_2 = arith.constant 0 : index
    %1 = vector.load %arg1[%c0_1, %c0_2] : memref<104x32xf32, #tpu.memory_space<vmem>>, vector<16x32xf32>
    %c16 = arith.constant 16 : index
    %c0_3 = arith.constant 0 : index
    %2 = vector.load %arg1[%c16, %c0_3] : memref<104x32xf32, #tpu.memory_space<vmem>>, vector<1x32xf32>
    %c24 = arith.constant 24 : index
    %c0_4 = arith.constant 0 : index
    %3 = vector.load %arg1[%c24, %c0_4] : memref<104x32xf32, #tpu.memory_space<vmem>>, vector<32x32xf32>
    %c56 = arith.constant 56 : index
    %c0_5 = arith.constant 0 : index
    %4 = vector.load %arg1[%c56, %c0_5] : memref<104x32xf32, #tpu.memory_space<vmem>>, vector<1x32xf32>
    %c64 = arith.constant 64 : index
    %c0_6 = arith.constant 0 : index
    %5 = vector.load %arg1[%c64, %c0_6] : memref<104x32xf32, #tpu.memory_space<vmem>>, vector<32x32xf32>
    %6 = vector.extract_strided_slice %5 {offsets = [0, 0], sizes = [32, 8], strides = [1, 1]} : vector<32x32xf32> to vector<32x8xf32>
    %c96 = arith.constant 96 : index
    %c0_7 = arith.constant 0 : index
    %7 = vector.load %arg1[%c96, %c0_7] : memref<104x32xf32, #tpu.memory_space<vmem>>, vector<1x32xf32>
    %8 = vector.extract_strided_slice %7 {offsets = [0, 0], sizes = [1, 8], strides = [1, 1]} : vector<1x32xf32> to vector<1x8xf32>
    %cst = arith.constant dense<0.000000e+00> : vector<16x32xf32>
    %9 = tpu.matmul %0, %1, %cst {dimension_numbers = #tpu.dot_dimension_numbers<[1], [0], [0], [1], [0, 0, 1, 1], [], []>} : vector<16x16xf32>, vector<16x32xf32>, vector<16x32xf32> -> vector<16x32xf32>
    %10 = vector.broadcast %2 : vector<1x32xf32> to vector<16x32xf32>
    %11 = arith.addf %9, %10 : vector<16x32xf32>
    %cst_8 = arith.constant 0.000000e+00 : f32
    %12 = vector.broadcast %cst_8 : f32 to vector<16x32xf32>
    %13 = arith.maximumf %11, %12 : vector<16x32xf32>
    %cst_9 = arith.constant dense<0.000000e+00> : vector<16x32xf32>
    %14 = tpu.matmul %13, %3, %cst_9 {dimension_numbers = #tpu.dot_dimension_numbers<[1], [0], [0], [1], [0, 0, 1, 1], [], []>} : vector<16x32xf32>, vector<32x32xf32>, vector<16x32xf32> -> vector<16x32xf32>
    %15 = vector.broadcast %4 : vector<1x32xf32> to vector<16x32xf32>
    %16 = arith.addf %14, %15 : vector<16x32xf32>
    %cst_10 = arith.constant 0.000000e+00 : f32
    %17 = vector.broadcast %cst_10 : f32 to vector<16x32xf32>
    %18 = arith.maximumf %16, %17 : vector<16x32xf32>
    %cst_11 = arith.constant dense<0.000000e+00> : vector<16x8xf32>
    %19 = tpu.matmul %18, %6, %cst_11 {dimension_numbers = #tpu.dot_dimension_numbers<[1], [0], [0], [1], [0, 0, 1, 1], [], []>} : vector<16x32xf32>, vector<32x8xf32>, vector<16x8xf32> -> vector<16x8xf32>
    %20 = vector.broadcast %8 : vector<1x8xf32> to vector<16x8xf32>
    %21 = arith.addf %19, %20 : vector<16x8xf32>
    %22 = math.tanh %21 : vector<16x8xf32>
    %23 = vector.shape_cast %22 : vector<16x8xf32> to vector<2x8x8xf32>
    %cst_12 = arith.constant dense<0.000000e+00> : vector<2x8xf32>
    %24 = vector.multi_reduction <add>, %23, %cst_12 [1] : vector<2x8x8xf32> to vector<2x8xf32>
    %cst_13 = arith.constant 1.250000e-01 : f32
    %25 = vector.broadcast %cst_13 : f32 to vector<2x8xf32>
    %26 = arith.mulf %24, %25 : vector<2x8xf32>
    %c0_14 = arith.constant 0 : index
    %c0_15 = arith.constant 0 : index
    %27 = vector.load %arg2[%c0_14, %c0_15] : memref<2x8xf32, #tpu.memory_space<vmem>>, vector<2x8xf32>
    tpu.vector_store %arg2[%c0_14, %c0_15], %26 {strides = array<i32>} : memref<2x8xf32, #tpu.memory_space<vmem>>, vector<2x8xf32>,
    return
  }
}

</mosaic_0001>

<llo_original>
// kernel: tpu_custom_call.1
$region0: #{tpu_custom_call.1}
  #allocation0 [shape = 'u32[]', space=smem, size = 0x4, offset = 0x4, fixed_abs, tag = 'smem constant byte address 0x4 - core index']
  #allocation1 [shape = 'u32[144,128]{1,0:T(1,128)}', space=vmem, size = 0x12000, scoped, tag = 'internal scratch']
  %s0 = inlined_call_operand.vmem [shape: f32[16,16], index: 0, kind: input, shape index: {}]
  %s1 = inlined_call_operand.vmem [shape: f32[104,32], index: 1, kind: input, shape index: {}]
  %s2 = inlined_call_operand.hbm [shape: f32[2,8], index: 2, kind: output, shape index: {}]
  %s3 = sld [smem:[#allocation0]]
  $region18: #{tpu_custom_call.1} parent=0
    _
  %s5 = ssub.s32 1, %s3
  %s6 = scalar_select 0, %s5, %s3
  $region1: #{tpu_custom_call.1} parent=0
    #allocation2 [shape = 'u8[1024]{0}', space=vmem, size = 0x400, scoped, tag = 'output window, operand 0, single buffered']
    #allocation3 [shape = 's32[1]{0}', space=sflag, size = 0x4, scoped, tag = 'scoped memory for tpu_custom_call.1']
    %7 = vsyncpa [#allocation3], 0
    // Predicated region
    $region2: #{tpu_custom_call.1} parent=1 // pred_check
      _
    $region3: #{tpu_custom_call.1} parent=1 // pred_check_branch
      %9 = sbr.rel (0) target = $region5
    $region4: #{tpu_custom_call.1} parent=1 // pred_region
      _
    $region5: #{tpu_custom_call.1} parent=1 // pred_fallthru
      _
    // Predicated region
    $region6: #{tpu_custom_call.1} parent=1 // pred_check
      _
    $region7: #{tpu_custom_call.1} parent=1 // pred_check_branch
      %11 = sbr.rel (0) target = $region9
    $region8: #{tpu_custom_call.1} parent=1 // pred_region
      _
    $region9: #{tpu_custom_call.1} parent=1 // pred_fallthru
      _
    %v12 = vld [vmem:[%s0] sm:$0xff]
    %v13 = vld [vmem:[%s0 + $0x8] sm:$0xff]
    %v14 = vld [vmem:[%s1] sm:$0xff]
    %v15 = vld [vmem:[%s1 + $0x8] sm:$0xff]
    %v16 = vld [vmem:[%s1 + $0x10] sm:$0x1]
    %v17 = vld [vmem:[%s1 + $0x18] sm:$0xff]
    %v18 = vld [vmem:[%s1 + $0x20] sm:$0xff]
    %v19 = vld [vmem:[%s1 + $0x28] sm:$0xff]
    %v20 = vld [vmem:[%s1 + $0x30] sm:$0xff]
    %v21 = vld [vmem:[%s1 + $0x38] sm:$0x1]
    %v22 = vld [vmem:[%s1 + $0x40] sm:$0xff]
    %v23 = vld [vmem:[%s1 + $0x48] sm:$0xff]
    %v24 = vld [vmem:[%s1 + $0x50] sm:$0xff]
    %v25 = vld [vmem:[%s1 + $0x58] sm:$0xff]
    %v26 = vld [vmem:[%s1 + $0x60] sm:$0x1]
    %v27 = vlaneseq
    %v28 = vshrl.u32 %v27, 7
    %v29 = vsub.s32 0, %v28
    %v30 = vrot.slane %v16, %v29
    %vm31 = vcmask 130048
    %v33 = vsel %vm31, %v12, 0
    %v36 = vsel %vm31, %v13, 0
    %38 = vmatprep.subr.mxu0 0.0
    %39 = vmatpush1.msra.mxu0 0.0
    %40 = vmatprep.subr.mxu0 0.0
    %41 = vmatpush1.msra.mxu0 0.0
    %42 = vmatprep.subr.mxu0 0.0
    %43 = vmatpush1.msra.mxu0 0.0
    %44 = vmatprep.subr.mxu0 0.0
    %45 = vmatpush1.msra.mxu0 0.0
    %46 = vmatprep.subr.mxu0 0.0
    %47 = vmatpush1.msra.mxu0 0.0
    %48 = vmatprep.subr.mxu0 0.0
    %49 = vmatpush1.msra.mxu0 0.0
    %50 = vmatprep.subr.mxu0 0.0
    %51 = vmatpush1.msra.mxu0 0.0
    %52 = vmatprep.subr.mxu0 0.0
    %53 = vmatpush1.msra.mxu0 0.0
    %54 = vmatprep.subr.mxu0 0.0
    %55 = vmatpush1.msra.mxu0 0.0
    %56 = vmatprep.subr.mxu0 0.0
    %57 = vmatpush1.msra.mxu0 0.0
    %58 = vmatprep.subr.mxu0 0.0
    %59 = vmatpush1.msra.mxu0 0.0
    %60 = vmatprep.subr.mxu0 0.0
    %61 = vmatpush1.msra.mxu0 0.0
    %62 = vmatprep.subr.mxu0 0.0
    %63 = vmatpush1.msra.mxu0 0.0
    %64 = vmatprep.subr.mxu0 0.0
    %65 = vmatpush1.msra.mxu0 0.0
    %66 = vmatprep.subr.mxu0 0.0
    %67 = vmatpush1.msra.mxu0 %v15
    %68 = vmatprep.subr.mxu0 0.0
    %69 = vmatpush1.msra.mxu0 %v14
    %70 = vmatprep.subr.mxu0 0.0
    %71 = vmatpush2.msra.mxu0 0.0
    %72 = vmatprep.subr.mxu0 0.0
    %73 = vmatpush2.msra.mxu0 0.0
    %74 = vmatprep.subr.mxu0 0.0
    %75 = vmatpush2.msra.mxu0 0.0
    %76 = vmatprep.subr.mxu0 0.0
    %77 = vmatpush2.msra.mxu0 0.0
    %78 = vmatprep.subr.mxu0 0.0
    %79 = vmatpush2.msra.mxu0 0.0
    %80 = vmatprep.subr.mxu0 0.0
    %81 = vmatpush2.msra.mxu0 0.0
    %82 = vmatprep.subr.mxu0 0.0
    %83 = vmatpush2.msra.mxu0 0.0
    %84 = vmatprep.subr.mxu0 0.0
    %85 = vmatpush2.msra.mxu0 0.0
    %86 = vmatprep.subr.mxu0 0.0
    %87 = vmatpush2.msra.mxu0 0.0
    %88 = vmatprep.subr.mxu0 0.0
    %89 = vmatpush2.msra.mxu0 0.0
    %90 = vmatprep.subr.mxu0 0.0
    %91 = vmatpush2.msra.mxu0 0.0
    %92 = vmatprep.subr.mxu0 0.0
    %93 = vmatpush2.msra.mxu0 0.0
    %94 = vmatprep.subr.mxu0 0.0
    %95 = vmatpush2.msra.mxu0 0.0
    %96 = vmatprep.subr.mxu0 0.0
    %97 = vmatpush2.msra.mxu0 0.0
    %98 = vmatprep.subr.mxu0 0.0
    %99 = vmatpush2.msra.mxu0 0.0
    %100 = vmatprep.subr.mxu0 0.0
    %101 = vmatpush2.msra.mxu0 0.0
    %102 = vmatprep.mubr.f32.mxu0 0.0
    %103 = vmatmul.mubr.f32.gmra.mxu0 %v33
    %v104 = vpop.f32.mrf.mxu0
    %v105 = vadd.f32 %v30, %v104
    %v106 = vpop.f32.mrf.mxu0
    %107 = vmatprep.mubr.f32.mxu0 0.0
    %108 = vmatmul.mubr.f32.gmra.mxu0 %v36
    %v109 = vpop.f32.mrf.mxu0
    %v110 = vadd.f32 %v30, %v109
    %v111 = vpop.f32.mrf.mxu0
    %112 = vdwg.mxu0
    %v113 = vmax.f32 %v105, 0.0
    %v114 = vmax.f32 %v110, 0.0
    %v115 = vlaneseq
    %v116 = vshrl.u32 %v115, 7
    %v117 = vsub.s32 0, %v116
    %v118 = vrot.slane %v21, %v117
    %vm119 = vcmask 261120
    %v121 = vsel %vm119, %v113, 0
    %v124 = vsel %vm119, %v114, 0
    %126 = vmatprep.subr.mxu0 0.0
    %127 = vmatpush1.msra.mxu0 0.0
    %128 = vmatprep.subr.mxu0 0.0
    %129 = vmatpush1.msra.mxu0 0.0
    %130 = vmatprep.subr.mxu0 0.0
    %131 = vmatpush1.msra.mxu0 0.0
    %132 = vmatprep.subr.mxu0 0.0
    %133 = vmatpush1.msra.mxu0 0.0
    %134 = vmatprep.subr.mxu0 0.0
    %135 = vmatpush1.msra.mxu0 0.0
    %136 = vmatprep.subr.mxu0 0.0
    %137 = vmatpush1.msra.mxu0 0.0
    %138 = vmatprep.subr.mxu0 0.0
    %139 = vmatpush1.msra.mxu0 0.0
    %140 = vmatprep.subr.mxu0 0.0
    %141 = vmatpush1.msra.mxu0 0.0
    %142 = vmatprep.subr.mxu0 0.0
    %143 = vmatpush1.msra.mxu0 0.0
    %144 = vmatprep.subr.mxu0 0.0
    %145 = vmatpush1.msra.mxu0 0.0
    %146 = vmatprep.subr.mxu0 0.0
    %147 = vmatpush1.msra.mxu0 0.0
    %148 = vmatprep.subr.mxu0 0.0
    %149 = vmatpush1.msra.mxu0 0.0
    %150 = vmatprep.subr.mxu0 0.0
    %151 = vmatpush1.msra.mxu0 %v20
    %152 = vmatprep.subr.mxu0 0.0
    %153 = vmatpush1.msra.mxu0 %v19
    %154 = vmatprep.subr.mxu0 0.0
    %155 = vmatpush1.msra.mxu0 %v18
    %156 = vmatprep.subr.mxu0 0.0
    %157 = vmatpush1.msra.mxu0 %v17
    %158 = vmatprep.subr.mxu0 0.0
    %159 = vmatpush2.msra.mxu0 0.0
    %160 = vmatprep.subr.mxu0 0.0
    %161 = vmatpush2.msra.mxu0 0.0
    %162 = vmatprep.subr.mxu0 0.0
    %163 = vmatpush2.msra.mxu0 0.0
    %164 = vmatprep.subr.mxu0 0.0
    %165 = vmatpush2.msra.mxu0 0.0
    %166 = vmatprep.subr.mxu0 0.0
    %167 = vmatpush2.msra.mxu0 0.0
    %168 = vmatprep.subr.mxu0 0.0
    %169 = vmatpush2.msra.mxu0 0.0
    %170 = vmatprep.subr.mxu0 0.0
    %171 = vmatpush2.msra.mxu0 0.0
    %172 = vmatprep.subr.mxu0 0.0
    %173 = vmatpush2.msra.mxu0 0.0
    %174 = vmatprep.subr.mxu0 0.0
    %175 = vmatpush2.msra.mxu0 0.0
    %176 = vmatprep.subr.mxu0 0.0
    %177 = vmatpush2.msra.mxu0 0.0
    %178 = vmatprep.subr.mxu0 0.0
    %179 = vmatpush2.msra.mxu0 0.0
    %180 = vmatprep.subr.mxu0 0.0
    %181 = vmatpush2.msra.mxu0 0.0
    %182 = vmatprep.subr.mxu0 0.0
    %183 = vmatpush2.msra.mxu0 0.0
    %184 = vmatprep.subr.mxu0 0.0
    %185 = vmatpush2.msra.mxu0 0.0
    %186 = vmatprep.subr.mxu0 0.0
    %187 = vmatpush2.msra.mxu0 0.0
    %188 = vmatprep.subr.mxu0 0.0
    %189 = vmatpush2.msra.mxu0 0.0
    %190 = vmatprep.mubr.f32.mxu0 0.0
    %191 = vmatmul.mubr.f32.gmra.mxu0 %v121
    %v192 = vpop.f32.mrf.mxu0
    %v193 = vadd.f32 %v118, %v192
    %v194 = vpop.f32.mrf.mxu0
    %195 = vmatprep.mubr.f32.mxu0 0.0
    %196 = vmatmul.mubr.f32.gmra.mxu0 %v124
    %v197 = vpop.f32.mrf.mxu0
    %v198 = vadd.f32 %v118, %v197
    %v199 = vpop.f32.mrf.mxu0
    %200 = vdwg.mxu0
    %v201 = vmax.f32 %v193, 0.0
    %v202 = vmax.f32 %v198, 0.0
    %v203 = vlaneseq
    %v204 = vshrl.u32 %v203, 7
    %v205 = vsub.s32 0, %v204
    %v206 = vrot.slane %v26, %v205
    %v208 = vsel %vm119, %v201, 0
    %v211 = vsel %vm119, %v202, 0
    %213 = vmatprep.subr.mxu0 0.0
    %214 = vmatpush1.msra.mxu0 0.0
    %215 = vmatprep.subr.mxu0 0.0
    %216 = vmatpush1.msra.mxu0 0.0
    %217 = vmatprep.subr.mxu0 0.0
    %218 = vmatpush1.msra.mxu0 0.0
    %219 = vmatprep.subr.mxu0 0.0
    %220 = vmatpush1.msra.mxu0 0.0
    %221 = vmatprep.subr.mxu0 0.0
    %222 = vmatpush1.msra.mxu0 0.0
    %223 = vmatprep.subr.mxu0 0.0
    %224 = vmatpush1.msra.mxu0 0.0
    %225 = vmatprep.subr.mxu0 0.0
    %226 = vmatpush1.msra.mxu0 0.0
    %227 = vmatprep.subr.mxu0 0.0
    %228 = vmatpush1.msra.mxu0 0.0
    %229 = vmatprep.subr.mxu0 0.0
    %230 = vmatpush1.msra.mxu0 0.0
    %231 = vmatprep.subr.mxu0 0.0
    %232 = vmatpush1.msra.mxu0 0.0
    %233 = vmatprep.subr.mxu0 0.0
    %234 = vmatpush1.msra.mxu0 0.0
    %235 = vmatprep.subr.mxu0 0.0
    %236 = vmatpush1.msra.mxu0 0.0
    %237 = vmatprep.subr.mxu0 0.0
    %238 = vmatpush1.msra.mxu0 %v25
    %239 = vmatprep.subr.mxu0 0.0
    %240 = vmatpush1.msra.mxu0 %v24
    %241 = vmatprep.subr.mxu0 0.0
    %242 = vmatpush1.msra.mxu0 %v23
    %243 = vmatprep.subr.mxu0 0.0
    %244 = vmatpush1.msra.mxu0 %v22
    %245 = vmatprep.subr.mxu0 0.0
    %246 = vmatpush2.msra.mxu0 0.0
    %247 = vmatprep.subr.mxu0 0.0
    %248 = vmatpush2.msra.mxu0 0.0
    %249 = vmatprep.subr.mxu0 0.0
    %250 = vmatpush2.msra.mxu0 0.0
    %251 = vmatprep.subr.mxu0 0.0
    %252 = vmatpush2.msra.mxu0 0.0
    %253 = vmatprep.subr.mxu0 0.0
    %254 = vmatpush2.msra.mxu0 0.0
    %255 = vmatprep.subr.mxu0 0.0
    %256 = vmatpush2.msra.mxu0 0.0
    %257 = vmatprep.subr.mxu0 0.0
    %258 = vmatpush2.msra.mxu0 0.0
    %259 = vmatprep.subr.mxu0 0.0
    %260 = vmatpush2.msra.mxu0 0.0
    %261 = vmatprep.subr.mxu0 0.0
    %262 = vmatpush2.msra.mxu0 0.0
    %263 = vmatprep.subr.mxu0 0.0
    %264 = vmatpush2.msra.mxu0 0.0
    %265 = vmatprep.subr.mxu0 0.0
    %266 = vmatpush2.msra.mxu0 0.0
    %267 = vmatprep.subr.mxu0 0.0
    %268 = vmatpush2.msra.mxu0 0.0
    %269 = vmatprep.subr.mxu0 0.0
    %270 = vmatpush2.msra.mxu0 0.0
    %271 = vmatprep.subr.mxu0 0.0
    %272 = vmatpush2.msra.mxu0 0.0
    %273 = vmatprep.subr.mxu0 0.0
    %274 = vmatpush2.msra.mxu0 0.0
    %275 = vmatprep.subr.mxu0 0.0
    %276 = vmatpush2.msra.mxu0 0.0
    %277 = vmatprep.mubr.f32.mxu0 0.0
    %278 = vmatmul.mubr.f32.gmra.mxu0 %v208
    %v279 = vpop.f32.mrf.mxu0
    %v280 = vadd.f32 %v206, %v279
    %v281 = vpop.f32.mrf.mxu0
    %282 = vmatprep.mubr.f32.mxu0 0.0
    %283 = vmatmul.mubr.f32.gmra.mxu0 %v211
    %v284 = vpop.f32.mrf.mxu0
    %v285 = vadd.f32 %v206, %v284
    %v286 = vpop.f32.mrf.mxu0
    %287 = vdwg.mxu0
    %v288 = vtanh.pop %v280
    %v289 = vtanh.pop %v285
    %vm290 = vcmask 64512
    %v291 = vsel %vm290, %v288, 0.0
    %v292 = vrot.slane %v291, 4
    %v293 = vadd.f32 %v291, %v292
    %v294 = vrot.slane %v293, 2
    %v295 = vadd.f32 %v293, %v294
    %v296 = vrot.slane %v295, 1
    %v297 = vadd.f32 %v295, %v296
    %v298 = vsel %vm290, %v289, 0.0
    %v299 = vrot.slane %v298, 4
    %v300 = vadd.f32 %v298, %v299
    %v301 = vrot.slane %v300, 2
    %v302 = vadd.f32 %v300, %v301
    %v303 = vrot.slane %v302, 1
    %v304 = vadd.f32 %v302, %v303
    %v305 = vmul.f32 %v297, 0.125
    %v306 = vmul.f32 %v304, 0.125
    %vm309 = vcmask 1041409
    %v310 = vsel %vm309, %v306, %v305
    %vm312 = vcmask 58368
    %313 = vst.msk [vmem:[#allocation2] sm:$0x3] %vm312, %v310
    // Predicated region
    $region10: #{tpu_custom_call.1} parent=1 // pred_check
      _
    $region11: #{tpu_custom_call.1} parent=1 // pred_check_branch
      %315 = sbr.rel (0) target = $region13
    $region12: #{tpu_custom_call.1} parent=1 // pred_region
      %s317 = ssub.s32 32, 32
      %318 = vsyncadd [#allocation3], %s317
      %s320 = sshll.u32 [#allocation2], 4
      %s321 = int_to_ptr.vmem [resolvable:$true] %s320
      %323 = dma.vmem_to_hbm [thread:$0]  %s321, 32, %s2, [#allocation3]
    $region13: #{tpu_custom_call.1} parent=1 // pred_fallthru
      _
    // Predicated region
    $region14: #{tpu_custom_call.1} parent=1 // pred_check
      _
    $region15: #{tpu_custom_call.1} parent=1 // pred_check_branch
      %325 = sbr.rel (0) target = $region17
    $region16: #{tpu_custom_call.1} parent=1 // pred_region
      %326 = dma.done [#allocation3], 32
    $region17: #{tpu_custom_call.1} parent=1 // pred_fallthru
      _
    %327 = vsyncpa [#allocation3], 1

</llo_original>
